<compile_context>
chip_gen: v7x
topology: tpu7x:2x2x1
jax: 0.10.0
libtpu: 0.0.40
codegen_flags: <defaults>
</compile_context>

<pallas_src>
import jax
import jax.numpy as jnp
from jax.experimental import pallas as pl
from jax.experimental.pallas import tpu as pltpu


def _round_up(x, m):
    return (x + m - 1) // m * m


def _edge_mlp_kernel(x_ref, w1_ref, b1_ref, w2_ref, b2_ref, w3_ref, b3_ref,
                     o_ref):
    # Layer 1: one fused (TM, 3H) @ (3H, 2H) matmul (the concat was folded into
    # the x stream in the wrapper).  bf16 operands, f32 accumulation.
    h1 = jnp.dot(x_ref[...], w1_ref[...], preferred_element_type=jnp.float32)
    h1 = jnp.maximum(h1 + b1_ref[...], 0.0).astype(jnp.bfloat16)

    # Layer 2: (TM, 2H) @ (2H, H).
    h2 = jnp.dot(h1, w2_ref[...], preferred_element_type=jnp.float32)
    h2 = jnp.maximum(h2 + b2_ref[...], 0.0).astype(jnp.bfloat16)

    # Layer 3: (TM, H) @ (H, d_out) — the tiny W3 is the stationary MXU operand.
    out = jnp.dot(h2, w3_ref[...], preferred_element_type=jnp.float32)
    o_ref[...] = (out + b3_ref[...]).astype(o_ref.dtype)


def _edge_mlp_pallas(x, w1, b1, w2, b2, w3, b3, *, tile_m):
    """x: (E, 3H) bf16 fused per-edge features.  Returns (E, d_out) f32."""
    E, K = x.shape
    d_out = w3.shape[1]
    n_tiles = pl.cdiv(E, tile_m)          # ragged tail: Pallas masks the writes

    row_map = lambda i: (i, 0)            # per-edge tiles
    full_map = lambda i: (0, 0)           # weights/biases: fetched once

    return pl.pallas_call(
        _edge_mlp_kernel,
        out_shape=jax.ShapeDtypeStruct((E, d_out), jnp.float32),
        grid_spec=pltpu.PrefetchScalarGridSpec(
            num_scalar_prefetch=0,
            grid=(n_tiles,),
            in_specs=[
                # (If DMA is still exposed at large tile_m, this spec is the one
                # to deepen with pipeline_mode=pl.Buffered(3).)
                pl.BlockSpec((tile_m, K), row_map),   # fused edge features (bf16)
                pl.BlockSpec(w1.shape, full_map),     # W1 (3H, 2H)   bf16
                pl.BlockSpec(b1.shape, full_map),     # b1 (1, 2H)    f32
                pl.BlockSpec(w2.shape, full_map),     # W2 (2H, H)    bf16
                pl.BlockSpec(b2.shape, full_map),     # b2 (1, H)     f32
                pl.BlockSpec(w3.shape, full_map),     # W3 (H, d_out) bf16
                pl.BlockSpec(b3.shape, full_map),     # b3 (1, d_out) f32
            ],
            out_specs=pl.BlockSpec((tile_m, d_out), row_map),
        ),
        compiler_params=pltpu.CompilerParams(
            dimension_semantics=("parallel",),     # edge tiles shard across TCs
            vmem_limit_bytes=32 * 1024 * 1024,     # > v5e's 16 MiB default; safe on v7x's 64 MiB/TC
        ),
    )(x, w1, b1, w2, b2, w3, b3)


def mlp_predictor_forward(src_idx, dst_idx, h, e, params, *, tile_m=4096):
    """Equivalent of MLPPredictor.forward(g, h, e); the graph g is given by
    src_idx / dst_idx edge-endpoint arrays.  Handles arbitrary edge counts."""
    w1, b1, w2, b2, w3, b3 = params        # (in, out) weights, (1, out) biases
    E = e.shape[0]
    d_out = w3.shape[1]

    # Fused per-edge features: one (E, 3H) bf16 stream (same HBM bytes as the
    # three separate gather outputs materialized before, but a single kernel
    # input, a single K=3H layer-1 matmul, and no pad passes).  The row gather
    # itself stays in XLA.
    # TODO(synk): in-kernel gather from a VMEM-resident node table (see header).
    x = jnp.concatenate([h[src_idx], h[dst_idx], e],
                        axis=1).astype(jnp.bfloat16)           # (E, 3H)

    # Tile selection: big tiles amortize the ~0.35 us per-step pipeline overhead
    # (compute per byte is tiny here), but cap so the grid keeps >= ~8 steps so
    # v7x's two TensorCores each get several tiles with overlap.
    tm = min(tile_m, max(128, _round_up(pl.cdiv(E, 8), 128)))
    tm = _round_up(tm, 8)

    out = _edge_mlp_pallas(
        x,
        w1.astype(jnp.bfloat16), b1.reshape(1, -1).astype(jnp.float32),
        w2.astype(jnp.bfloat16), b2.reshape(1, -1).astype(jnp.float32),
        w3.astype(jnp.bfloat16), b3.reshape(1, -1).astype(jnp.float32),
        tile_m=tm)

    if d_out == 1:
        return out[:, 0]                   # (E,) — matches torch .squeeze(1)
    return out                             # (E, d_out)


def init_params(key, h_feats, out_feats):
    """Deterministic init mimicking nn.Linear (uniform(-1/sqrt(fan_in), ...)).
    Weights stored transposed vs. PyTorch, i.e. (in_dim, out_dim)."""
    dims = [(h_feats * 3, h_feats * 2), (h_feats * 2, h_feats), (h_feats, out_feats)]
    params = []
    for (d_in, d_out) in dims:
        key, kw, kb = jax.random.split(key, 3)
        bound = 1.0 / jnp.sqrt(d_in)
        w = jax.random.uniform(kw, (d_in, d_out), jnp.float32, -bound, bound)
        b = jax.random.uniform(kb, (1, d_out), jnp.float32, -bound, bound)
        params.extend([w, b])
    return tuple(params)


def _reference(src_idx, dst_idx, h, e, params):
    w1, b1, w2, b2, w3, b3 = params
    x = jnp.concatenate([h[src_idx], h[dst_idx], e], axis=1)
    y = jnp.maximum(x @ w1 + b1, 0.0)
    y = jnp.maximum(y @ w2 + b2, 0.0)
    y = y @ w3 + b3
    return y[:, 0] if y.shape[1] == 1 else y


if __name__ == "__main__":
    h_feats = 32
    out_feats = 1
    num_nodes = 16
    num_edges = 200   # deliberately NOT a multiple of the tile: exercises the ragged grid

    key = jax.random.PRNGKey(0)
    k_h, k_e, k_src, k_dst, k_p = jax.random.split(key, 5)

    h = jax.random.normal(k_h, (num_nodes, h_feats), jnp.float32)
    e = jax.random.normal(k_e, (num_edges, h_feats), jnp.float32)
    src_idx = jax.random.randint(k_src, (num_edges,), 0, num_nodes)
    dst_idx = jax.random.randint(k_dst, (num_edges,), 0, num_nodes)

    params = init_params(k_p, h_feats, out_feats)

    # Auto tile cap at this E gives tm=128 -> a 2-step ragged grid (200 = 128 + 72).
    score = mlp_predictor_forward(src_idx, dst_idx, h, e, params)
    score = jax.block_until_ready(score)

    ref = _reference(src_idx, dst_idx, h, e, params)
    assert score.shape == (num_edges,)
    # bf16 activations/weights: compare against the f32 reference with a
    # scale-normalized tolerance (bf16 parity is ~0.1-1% relative error).
    err = float(jnp.max(jnp.abs(score - ref)))
    scale = float(jnp.max(jnp.abs(ref))) + 1e-6
    assert err <= 0.05 * scale, f"mismatch vs reference: err={err:.4g}, scale={scale:.4g}"

    print("KERNEL_OK")
</pallas_src>

<mosaic_0001>
module attributes {stable_mosaic.version = 11 : i64} {
  func.func @_edge_mlp_kernel(%arg0: i32, %arg1: memref<128x96xbf16, #tpu.memory_space<vmem>>, %arg2: memref<96x64xbf16, #tpu.memory_space<vmem>>, %arg3: memref<1x64xf32, #tpu.memory_space<vmem>>, %arg4: memref<64x32xbf16, #tpu.memory_space<vmem>>, %arg5: memref<1x32xf32, #tpu.memory_space<vmem>>, %arg6: memref<32x1xbf16, #tpu.memory_space<vmem>>, %arg7: memref<1x1xf32, #tpu.memory_space<vmem>>, %arg8: memref<128x1xf32, #tpu.memory_space<vmem>>) attributes {dimension_semantics = [#tpu.dimension_semantics<parallel>], iteration_bounds = array<i64: 2>, scalar_prefetch = 0 : i64, scratch_operands = 0 : i64, tpu.core_type = #tpu.core_type<tc>, window_params = [{transform_indices = @transform_0, window_bounds = array<i64: 128, 96>}, {pipeline_mode = #tpu.pipeline_mode<synchronous>, transform_indices = @transform_1, window_bounds = array<i64: 96, 64>}, {pipeline_mode = #tpu.pipeline_mode<synchronous>, transform_indices = @transform_2, window_bounds = array<i64: 1, 64>}, {pipeline_mode = #tpu.pipeline_mode<synchronous>, transform_indices = @transform_3, window_bounds = array<i64: 64, 32>}, {pipeline_mode = #tpu.pipeline_mode<synchronous>, transform_indices = @transform_4, window_bounds = array<i64: 1, 32>}, {pipeline_mode = #tpu.pipeline_mode<synchronous>, transform_indices = @transform_5, window_bounds = array<i64: 32, 1>}, {pipeline_mode = #tpu.pipeline_mode<synchronous>, transform_indices = @transform_6, window_bounds = array<i64: 1, 1>}, {transform_indices = @transform_7, window_bounds = array<i64: 128, 1>}]} {
    %c0 = arith.constant 0 : index
    %c0_0 = arith.constant 0 : index
    %0 = vector.load %arg1[%c0, %c0_0] : memref<128x96xbf16, #tpu.memory_space<vmem>>, vector<128x96xbf16>
    %c0_1 = arith.constant 0 : index
    %c0_2 = arith.constant 0 : index
    %1 = vector.load %arg2[%c0_1, %c0_2] : memref<96x64xbf16, #tpu.memory_space<vmem>>, vector<96x64xbf16>
    %cst = arith.constant dense<0.000000e+00> : vector<128x64xf32>
    %2 = tpu.matmul %0, %1, %cst {dimension_numbers = #tpu.dot_dimension_numbers<[1], [0], [0], [1], [0, 0, 1, 1], [], []>} : vector<128x96xbf16>, vector<96x64xbf16>, vector<128x64xf32> -> vector<128x64xf32>
    %c0_3 = arith.constant 0 : index
    %c0_4 = arith.constant 0 : index
    %3 = vector.load %arg3[%c0_3, %c0_4] : memref<1x64xf32, #tpu.memory_space<vmem>>, vector<1x64xf32>
    %4 = vector.broadcast %3 : vector<1x64xf32> to vector<128x64xf32>
    %5 = arith.addf %2, %4 : vector<128x64xf32>
    %cst_5 = arith.constant 0.000000e+00 : f32
    %6 = vector.broadcast %cst_5 : f32 to vector<128x64xf32>
    %7 = arith.maximumf %5, %6 : vector<128x64xf32>
    %8 = arith.truncf %7 : vector<128x64xf32> to vector<128x64xbf16>
    %c0_6 = arith.constant 0 : index
    %c0_7 = arith.constant 0 : index
    %9 = vector.load %arg4[%c0_6, %c0_7] : memref<64x32xbf16, #tpu.memory_space<vmem>>, vector<64x32xbf16>
    %cst_8 = arith.constant dense<0.000000e+00> : vector<128x32xf32>
    %10 = tpu.matmul %8, %9, %cst_8 {dimension_numbers = #tpu.dot_dimension_numbers<[1], [0], [0], [1], [0, 0, 1, 1], [], []>} : vector<128x64xbf16>, vector<64x32xbf16>, vector<128x32xf32> -> vector<128x32xf32>
    %c0_9 = arith.constant 0 : index
    %c0_10 = arith.constant 0 : index
    %11 = vector.load %arg5[%c0_9, %c0_10] : memref<1x32xf32, #tpu.memory_space<vmem>>, vector<1x32xf32>
    %12 = vector.broadcast %11 : vector<1x32xf32> to vector<128x32xf32>
    %13 = arith.addf %10, %12 : vector<128x32xf32>
    %cst_11 = arith.constant 0.000000e+00 : f32
    %14 = vector.broadcast %cst_11 : f32 to vector<128x32xf32>
    %15 = arith.maximumf %13, %14 : vector<128x32xf32>
    %16 = arith.truncf %15 : vector<128x32xf32> to vector<128x32xbf16>
    %c0_12 = arith.constant 0 : index
    %c0_13 = arith.constant 0 : index
    %17 = vector.load %arg6[%c0_12, %c0_13] : memref<32x1xbf16, #tpu.memory_space<vmem>>, vector<32x1xbf16>
    %cst_14 = arith.constant dense<0.000000e+00> : vector<128x1xf32>
    %18 = tpu.matmul %16, %17, %cst_14 {dimension_numbers = #tpu.dot_dimension_numbers<[1], [0], [0], [1], [0, 0, 1, 1], [], []>} : vector<128x32xbf16>, vector<32x1xbf16>, vector<128x1xf32> -> vector<128x1xf32>
    %c0_15 = arith.constant 0 : index
    %c0_16 = arith.constant 0 : index
    %19 = vector.load %arg7[%c0_15, %c0_16] : memref<1x1xf32, #tpu.memory_space<vmem>>, vector<1x1xf32>
    %20 = vector.broadcast %19 : vector<1x1xf32> to vector<128x1xf32>
    %21 = arith.addf %18, %20 : vector<128x1xf32>
    %c0_17 = arith.constant 0 : index
    %c0_18 = arith.constant 0 : index
    %22 = vector.load %arg8[%c0_17, %c0_18] : memref<128x1xf32, #tpu.memory_space<vmem>>, vector<128x1xf32>
    tpu.vector_store %arg8[%c0_17, %c0_18], %21 {strides = array<i32>} : memref<128x1xf32, #tpu.memory_space<vmem>>, vector<128x1xf32>,
    return
  }
  func.func @transform_0(%arg0: i32) -> (i32, i32) {
    %c0_i32 = arith.constant 0 : i32
    %c0_i32_0 = arith.constant 0 : i32
    return %arg0, %c0_i32 : i32, i32
  }
  func.func @transform_1(%arg0: i32) -> (i32, i32) {
    %c0_i32 = arith.constant 0 : i32
    %c0_i32_0 = arith.constant 0 : i32
    %c0_i32_1 = arith.constant 0 : i32
    return %c0_i32, %c0_i32_0 : i32, i32
  }
  func.func @transform_2(%arg0: i32) -> (i32, i32) {
    %c0_i32 = arith.constant 0 : i32
    %c0_i32_0 = arith.constant 0 : i32
    %c0_i32_1 = arith.constant 0 : i32
    return %c0_i32, %c0_i32_0 : i32, i32
  }
  func.func @transform_3(%arg0: i32) -> (i32, i32) {
    %c0_i32 = arith.constant 0 : i32
    %c0_i32_0 = arith.constant 0 : i32
    %c0_i32_1 = arith.constant 0 : i32
    return %c0_i32, %c0_i32_0 : i32, i32
  }
  func.func @transform_4(%arg0: i32) -> (i32, i32) {
    %c0_i32 = arith.constant 0 : i32
    %c0_i32_0 = arith.constant 0 : i32
    %c0_i32_1 = arith.constant 0 : i32
    return %c0_i32, %c0_i32_0 : i32, i32
  }
  func.func @transform_5(%arg0: i32) -> (i32, i32) {
    %c0_i32 = arith.constant 0 : i32
    %c0_i32_0 = arith.constant 0 : i32
    %c0_i32_1 = arith.constant 0 : i32
    return %c0_i32, %c0_i32_0 : i32, i32
  }
  func.func @transform_6(%arg0: i32) -> (i32, i32) {
    %c0_i32 = arith.constant 0 : i32
    %c0_i32_0 = arith.constant 0 : i32
    %c0_i32_1 = arith.constant 0 : i32
    return %c0_i32, %c0_i32_0 : i32, i32
  }
  func.func @transform_7(%arg0: i32) -> (i32, i32) {
    %c0_i32 = arith.constant 0 : i32
    %c0_i32_0 = arith.constant 0 : i32
    return %arg0, %c0_i32 : i32, i32
  }
}

</mosaic_0001>

<llo_original>
// kernel: tpu_custom_call.1
$region0: #{tpu_custom_call.1}
  #allocation0 [shape = 'u32[]', space=smem, size = 0x4, offset = 0x4, fixed_abs, tag = 'smem constant byte address 0x4 - core index']
  #allocation1 [shape = 'u32[144,128]{1,0:T(1,128)}', space=vmem, size = 0x12000, scoped, tag = 'internal scratch']
  #allocation2 [shape = 'f32[1,1]{1,0:T(1,128)S(1)}', space=vmem, size = 0x200, scoped, tag = 'scoped memory for tpu_custom_call.1']
  %s0 = inlined_call_operand.vmem [shape: bf16[200,96], index: 0, kind: input, shape index: {}]
  %s1 = inlined_call_operand.vmem [shape: bf16[96,64], index: 1, kind: input, shape index: {}]
  %s2 = inlined_call_operand.vmem [shape: f32[1,64], index: 2, kind: input, shape index: {}]
  %s3 = inlined_call_operand.vmem [shape: bf16[64,32], index: 3, kind: input, shape index: {}]
  %s4 = inlined_call_operand.vmem [shape: f32[1,32], index: 4, kind: input, shape index: {}]
  %s5 = inlined_call_operand.vmem [shape: bf16[32,1], index: 5, kind: input, shape index: {}]
  %s6 = inlined_call_operand.<no memory space> [shape: f32[1,1], index: 6, kind: input, shape index: {}]
  %s7 = inlined_call_operand.vmem [shape: f32[200,1], index: 7, kind: output, shape index: {}]
  %s8 = sld [smem:[#allocation0]]
  $region109: #{tpu_custom_call.1} parent=0
    _
  %s10 = ssub.s32 1, %s8
  %s11 = scalar_select 0, %s10, %s8
  %v12 = vstv %s6
  %13 = vst [vmem:[#allocation2] sm:$0x1] %v12
  $region1: #{tpu_custom_call.1} parent=0
    #allocation3 [shape = 'u8[131072]{0}', space=vmem, size = 0x20000, scoped, tag = 'output window, operand 0']
    loop: start=0, step=1, limit=4
    $region2: #{tpu_custom_call.1} parent=1 // loop_pre_header
      _
    $region3: #{tpu_custom_call.1} parent=1 // loop_header
      %s15 = sphi 0, %s19
      %p16 = scmp.ge.s32.totalorder %s15, 4
      %s25 = sphi 0, %s27
      %s28 = sphi 0, %s25
      %s29 = sphi 0, %s28
      %s45 = sphi 0, %s29
      %s49 = sphi 0, %s49
      %s51 = sphi 0, %s49
      %s52 = sphi 0, %s51
      %s66 = sphi 0, %s52
      %s70 = sphi 0, %s70
      %s72 = sphi 0, %s70
      %s73 = sphi 0, %s72
      %s87 = sphi 0, %s73
      %s91 = sphi 0, %s91
      %s93 = sphi 0, %s91
      %s94 = sphi 0, %s93
      %s108 = sphi 0, %s94
      %s112 = sphi 0, %s112
      %s114 = sphi 0, %s112
      %s115 = sphi 0, %s114
      %s129 = sphi 0, %s115
      %s133 = sphi 0, %s133
      %s135 = sphi 0, %s133
      %s136 = sphi 0, %s135
      %s150 = sphi 0, %s136
      %s154 = sphi 0, %s154
      %s156 = sphi 0, %s154
      %s157 = sphi 0, %s156
      %s171 = sphi 0, %s157
      %s177 = sphi 0, %s179
      %s180 = sphi 0, %s177
      %s181 = sphi 0, %s180
      %s197 = sphi 0, %s181
    $region4: #{tpu_custom_call.1} parent=1 // loop_header_branch
      %18 = sbr.rel (%p16) target = $region8
    $region5: #{tpu_custom_call.1} parent=1 // loop_body
      %s20 = ssub.s32 %s15, 1
      %s21 = ssub.s32 %s15, 2
      %s22 = sadd.s32 %s15, 1
      %s23 = ssub.s32 %s15, %s22
      %p24 = scmp.eq.s32.totalorder %s23, 0
      %s26 = sadd.s32 %s25, 1
      %s27 = scalar_select %p24, %s25, %s26
      %p30 = pneg %p24
      %p31 = scmp.eq.s32.totalorder %s15, 1
      %p32 = por %p30, %p31
      %p33 = scmp.ne.s32.totalorder %s25, %s28
      %p34 = scmp.eq.s32.totalorder %s15, 0
      %p35 = por %p33, %p34
      %p36 = scmp.ne.s32.totalorder %s25, %s28
      %p37 = scmp.eq.s32.totalorder %s20, 1
      %p38 = por %p36, %p37
      %p39 = scmp.ne.s32.totalorder %s28, %s29
      %p40 = scmp.eq.s32.totalorder %s20, 0
      %p41 = por %p39, %p40
      %p42 = scmp.ne.s32.totalorder %s28, %s29
      %p43 = scmp.eq.s32.totalorder %s21, 1
      %p44 = por %p42, %p43
      %p46 = scmp.ne.s32.totalorder %s29, %s45
      %p47 = scmp.eq.s32.totalorder %s21, 0
      %p48 = por %p46, %p47
      %s50 = sadd.s32 %s49, 1
      %p53 = scmp.eq.s32.totalorder %s15, 1
      %p54 = scmp.ne.s32.totalorder %s49, %s51
      %p55 = scmp.eq.s32.totalorder %s15, 0
      %p56 = por %p54, %p55
      %p57 = scmp.ne.s32.totalorder %s49, %s51
      %p58 = scmp.eq.s32.totalorder %s20, 1
      %p59 = por %p57, %p58
      %p60 = scmp.ne.s32.totalorder %s51, %s52
      %p61 = scmp.eq.s32.totalorder %s20, 0
      %p62 = por %p60, %p61
      %p63 = scmp.ne.s32.totalorder %s51, %s52
      %p64 = scmp.eq.s32.totalorder %s21, 1
      %p65 = por %p63, %p64
      %p67 = scmp.ne.s32.totalorder %s52, %s66
      %p68 = scmp.eq.s32.totalorder %s21, 0
      %p69 = por %p67, %p68
      %s71 = sadd.s32 %s70, 1
      %p74 = scmp.eq.s32.totalorder %s15, 1
      %p75 = scmp.ne.s32.totalorder %s70, %s72
      %p76 = scmp.eq.s32.totalorder %s15, 0
      %p77 = por %p75, %p76
      %p78 = scmp.ne.s32.totalorder %s70, %s72
      %p79 = scmp.eq.s32.totalorder %s20, 1
      %p80 = por %p78, %p79
      %p81 = scmp.ne.s32.totalorder %s72, %s73
      %p82 = scmp.eq.s32.totalorder %s20, 0
      %p83 = por %p81, %p82
      %p84 = scmp.ne.s32.totalorder %s72, %s73
      %p85 = scmp.eq.s32.totalorder %s21, 1
      %p86 = por %p84, %p85
      %p88 = scmp.ne.s32.totalorder %s73, %s87
      %p89 = scmp.eq.s32.totalorder %s21, 0
      %p90 = por %p88, %p89
      %s92 = sadd.s32 %s91, 1
      %p95 = scmp.eq.s32.totalorder %s15, 1
      %p96 = scmp.ne.s32.totalorder %s91, %s93
      %p97 = scmp.eq.s32.totalorder %s15, 0
      %p98 = por %p96, %p97
      %p99 = scmp.ne.s32.totalorder %s91, %s93
      %p100 = scmp.eq.s32.totalorder %s20, 1
      %p101 = por %p99, %p100
      %p102 = scmp.ne.s32.totalorder %s93, %s94
      %p103 = scmp.eq.s32.totalorder %s20, 0
      %p104 = por %p102, %p103
      %p105 = scmp.ne.s32.totalorder %s93, %s94
      %p106 = scmp.eq.s32.totalorder %s21, 1
      %p107 = por %p105, %p106
      %p109 = scmp.ne.s32.totalorder %s94, %s108
      %p110 = scmp.eq.s32.totalorder %s21, 0
      %p111 = por %p109, %p110
      %s113 = sadd.s32 %s112, 1
      %p116 = scmp.eq.s32.totalorder %s15, 1
      %p117 = scmp.ne.s32.totalorder %s112, %s114
      %p118 = scmp.eq.s32.totalorder %s15, 0
      %p119 = por %p117, %p118
      %p120 = scmp.ne.s32.totalorder %s112, %s114
      %p121 = scmp.eq.s32.totalorder %s20, 1
      %p122 = por %p120, %p121
      %p123 = scmp.ne.s32.totalorder %s114, %s115
      %p124 = scmp.eq.s32.totalorder %s20, 0
      %p125 = por %p123, %p124
      %p126 = scmp.ne.s32.totalorder %s114, %s115
      %p127 = scmp.eq.s32.totalorder %s21, 1
      %p128 = por %p126, %p127
      %p130 = scmp.ne.s32.totalorder %s115, %s129
      %p131 = scmp.eq.s32.totalorder %s21, 0
      %p132 = por %p130, %p131
      %s134 = sadd.s32 %s133, 1
      %p137 = scmp.eq.s32.totalorder %s15, 1
      %p138 = scmp.ne.s32.totalorder %s133, %s135
      %p139 = scmp.eq.s32.totalorder %s15, 0
      %p140 = por %p138, %p139
      %p141 = scmp.ne.s32.totalorder %s133, %s135
      %p142 = scmp.eq.s32.totalorder %s20, 1
      %p143 = por %p141, %p142
      %p144 = scmp.ne.s32.totalorder %s135, %s136
      %p145 = scmp.eq.s32.totalorder %s20, 0
      %p146 = por %p144, %p145
      %p147 = scmp.ne.s32.totalorder %s135, %s136
      %p148 = scmp.eq.s32.totalorder %s21, 1
      %p149 = por %p147, %p148
      %p151 = scmp.ne.s32.totalorder %s136, %s150
      %p152 = scmp.eq.s32.totalorder %s21, 0
      %p153 = por %p151, %p152
      %s155 = sadd.s32 %s154, 1
      %p158 = scmp.eq.s32.totalorder %s15, 1
      %p159 = scmp.ne.s32.totalorder %s154, %s156
      %p160 = scmp.eq.s32.totalorder %s15, 0
      %p161 = por %p159, %p160
      %p162 = scmp.ne.s32.totalorder %s154, %s156
      %p163 = scmp.eq.s32.totalorder %s20, 1
      %p164 = por %p162, %p163
      %p165 = scmp.ne.s32.totalorder %s156, %s157
      %p166 = scmp.eq.s32.totalorder %s20, 0
      %p167 = por %p165, %p166
      %p168 = scmp.ne.s32.totalorder %s156, %s157
      %p169 = scmp.eq.s32.totalorder %s21, 1
      %p170 = por %p168, %p169
      %p172 = scmp.ne.s32.totalorder %s157, %s171
      %p173 = scmp.eq.s32.totalorder %s21, 0
      %p174 = por %p172, %p173
      %s175 = ssub.s32 %s15, %s22
      %p176 = scmp.eq.s32.totalorder %s175, 0
      %s178 = sadd.s32 %s177, 1
      %s179 = scalar_select %p176, %s177, %s178
      %p182 = pneg %p176
      %p183 = scmp.eq.s32.totalorder %s15, 1
      %p184 = por %p182, %p183
      %p185 = scmp.ne.s32.totalorder %s177, %s180
      %p186 = scmp.eq.s32.totalorder %s15, 0
      %p187 = por %p185, %p186
      %p188 = scmp.ne.s32.totalorder %s177, %s180
      %p189 = scmp.eq.s32.totalorder %s20, 1
      %p190 = por %p188, %p189
      %p191 = scmp.ne.s32.totalorder %s180, %s181
      %p192 = scmp.eq.s32.totalorder %s20, 0
      %p193 = por %p191, %p192
      %p194 = scmp.ne.s32.totalorder %s180, %s181
      %p195 = scmp.eq.s32.totalorder %s21, 1
      %p196 = por %p194, %p195
      %p198 = scmp.ne.s32.totalorder %s181, %s197
      %p199 = scmp.eq.s32.totalorder %s21, 0
      %p200 = por %p198, %p199
      %p201 = scmp.le.s32.totalorder 1, %s15
      %p202 = scmp.lt.s32.totalorder %s15, 3
      %p203 = pnand %p201, %p202
      %p204 = pneg %p203
      // Predicated region
      $region9: #{tpu_custom_call.1} parent=5 // pred_check
        _
      $region10: #{tpu_custom_call.1} parent=5 // pred_check_branch
        %206 = sbr.rel (%p203) target = $region12
      $region11: #{tpu_custom_call.1} parent=5 // pred_region
        %s207 = ssub.s32 %s15, 1
        // Predicated region
        $region13: #{tpu_custom_call.1} parent=11 // pred_check
          %p208 = pneg %p62
        $region14: #{tpu_custom_call.1} parent=11 // pred_check_branch
          %210 = sbr.rel (%p208) target = $region16
        $region15: #{tpu_custom_call.1} parent=11 // pred_region
          _
        $region16: #{tpu_custom_call.1} parent=11 // pred_fallthru
          _
        // Predicated region
        $region17: #{tpu_custom_call.1} parent=11 // pred_check
          %p211 = pneg %p83
        $region18: #{tpu_custom_call.1} parent=11 // pred_check_branch
          %213 = sbr.rel (%p211) target = $region20
        $region19: #{tpu_custom_call.1} parent=11 // pred_region
          _
        $region20: #{tpu_custom_call.1} parent=11 // pred_fallthru
          _
        // Predicated region
        $region21: #{tpu_custom_call.1} parent=11 // pred_check
          %p214 = pneg %p104
        $region22: #{tpu_custom_call.1} parent=11 // pred_check_branch
          %216 = sbr.rel (%p214) target = $region24
        $region23: #{tpu_custom_call.1} parent=11 // pred_region
          _
        $region24: #{tpu_custom_call.1} parent=11 // pred_fallthru
          _
        // Predicated region
        $region25: #{tpu_custom_call.1} parent=11 // pred_check
          %p217 = pneg %p125
        $region26: #{tpu_custom_call.1} parent=11 // pred_check_branch
          %219 = sbr.rel (%p217) target = $region28
        $region27: #{tpu_custom_call.1} parent=11 // pred_region
          _
        $region28: #{tpu_custom_call.1} parent=11 // pred_fallthru
          _
        // Predicated region
        $region29: #{tpu_custom_call.1} parent=11 // pred_check
          %p220 = pneg %p146
        $region30: #{tpu_custom_call.1} parent=11 // pred_check_branch
          %222 = sbr.rel (%p220) target = $region32
        $region31: #{tpu_custom_call.1} parent=11 // pred_region
          _
        $region32: #{tpu_custom_call.1} parent=11 // pred_fallthru
          _
        // Predicated region
        $region33: #{tpu_custom_call.1} parent=11 // pred_check
          %p223 = pneg %p167
        $region34: #{tpu_custom_call.1} parent=11 // pred_check_branch
          %225 = sbr.rel (%p223) target = $region36
        $region35: #{tpu_custom_call.1} parent=11 // pred_region
          _
        $region36: #{tpu_custom_call.1} parent=11 // pred_fallthru
          _
      $region12: #{tpu_custom_call.1} parent=5 // pred_fallthru
        _
      %p226 = scmp.lt.s32.totalorder %s15, 2
      // Predicated region
      $region37: #{tpu_custom_call.1} parent=5 // pred_check
        %p227 = pneg %p226
      $region38: #{tpu_custom_call.1} parent=5 // pred_check_branch
        %229 = sbr.rel (%p227) target = $region40
      $region39: #{tpu_custom_call.1} parent=5 // pred_region
        // Predicated region
        $region41: #{tpu_custom_call.1} parent=39 // pred_check
          %p230 = pneg %p35
        $region42: #{tpu_custom_call.1} parent=39 // pred_check_branch
          %232 = sbr.rel (%p230) target = $region44
        $region43: #{tpu_custom_call.1} parent=39 // pred_region
          %s233 = smul.u32 16, %s15
          %s234 = ssub.s32 25, %s233
          %p235 = scmp.lt.s32.totalorder %s234, 16
          %s236 = scalar_select %p235, %s234, 16
          %s237 = smul.u32 64, %s236
          %p238 = scmp.lt.s32.totalorder %s233, 24
          %s239 = scalar_select %p238, %s233, 24
          %s240 = smul.addr %s239, 4
          %s241 = scalar_lea.vmem %s0, %s240
          %s242 = smul.u32 16, %s15
          %s243 = ssub.s32 25, %s242
          %p244 = scmp.lt.s32.totalorder %s243, 16
          %s245 = scalar_select %p244, %s243, 16
          %s246 = smul.u32 64, %s245
        $region44: #{tpu_custom_call.1} parent=39 // pred_fallthru
          _
      $region40: #{tpu_custom_call.1} parent=5 // pred_fallthru
        _
      %p247 = scmp.le.s32.totalorder 1, %s15
      %p248 = scmp.lt.s32.totalorder %s15, 3
      %p249 = pnand %p247, %p248
      %p250 = pneg %p249
      // Predicated region
      $region45: #{tpu_custom_call.1} parent=5 // pred_check
        _
      $region46: #{tpu_custom_call.1} parent=5 // pred_check_branch
        %252 = sbr.rel (%p249) target = $region48
      $region47: #{tpu_custom_call.1} parent=5 // pred_region
        %s253 = ssub.s32 %s15, 1
        %s254 = smul.u32 16, %s20
        %s255 = ssub.s32 25, %s254
        %p256 = scmp.lt.s32.totalorder %s255, 16
        %s257 = scalar_select %p256, %s255, 16
        %s258 = smul.u32 64, %s257
        %p259 = scmp.lt.s32.totalorder %s254, 24
        %s260 = scalar_select %p259, %s254, 24
        %s261 = smul.addr %s260, 4
        %s262 = scalar_lea.vmem %s0, %s261
        %p263 = pneg %p41
        %p264 = pneg %p38
        %p265 = pneg %p62
        %p266 = pneg %p59
        %p267 = pneg %p83
        %p268 = pneg %p80
        %p269 = pneg %p104
        %p270 = pneg %p101
        %p271 = pneg %p125
        %p272 = pneg %p122
        %p273 = pneg %p146
        %p274 = pneg %p143
        %p275 = pneg %p167
        %p276 = pneg %p164
        %p277 = pneg %p193
        %p278 = pneg %p190
        %s279 = sand.u32 %s180, 1
        %s280 = sand.u32 %s180, 1
        %s281 = smul.addr %s280, 128
        %s282 = scalar_lea.vmem [#allocation3], %s281
        %s283 = smul.u32 16, %s20
        %s284 = ssub.s32 25, %s283
        %p285 = scmp.lt.s32.totalorder %s284, 16
        %s286 = scalar_select %p285, %s284, 16
        %s287 = smul.u32 64, %s286
        %p288 = scmp.lt.s32.totalorder %s283, 24
        %s289 = scalar_select %p288, %s283, 24
        %s290 = smul.addr %s289, 4
        %s291 = scalar_lea.vmem %s0, %s290
        %s292 = smul.u32 16, %s20
        %s293 = ssub.s32 25, %s292
        %p294 = scmp.lt.s32.totalorder %s293, 16
        %s295 = scalar_select %p294, %s293, 16
        %s296 = smul.u32 64, %s295
        %s297 = smul.u32 16, %s20
        %s298 = ssub.s32 25, %s297
        %p299 = scmp.lt.s32.totalorder %s298, 16
        %s300 = scalar_select %p299, %s298, 16
        %s301 = smul.u32 128, %s300
        %v303 = vld [vmem:[%s291] sm:$0xf]
        %v304 = vld [vmem:[%s291 + $0x4] sm:$0xf]
        %v305 = vld [vmem:[%s291 + $0x8] sm:$0xf]
        %v306 = vld [vmem:[%s291 + $0xc] sm:$0xf]
        %v307 = vld [vmem:[%s291 + $0x10] sm:$0xf]
        %v308 = vld [vmem:[%s291 + $0x14] sm:$0xf]
        %v309 = vld [vmem:[%s291 + $0x18] sm:$0xf]
        %v310 = vld [vmem:[%s291 + $0x1c] sm:$0xf]
        %v311 = vld [vmem:[%s291 + $0x20] sm:$0xf]
        %v312 = vld [vmem:[%s291 + $0x24] sm:$0xf]
        %v313 = vld [vmem:[%s291 + $0x28] sm:$0xf]
        %v314 = vld [vmem:[%s291 + $0x2c] sm:$0xf]
        %v315 = vld [vmem:[%s291 + $0x30] sm:$0xf]
        %v316 = vld [vmem:[%s291 + $0x34] sm:$0xf]
        %v317 = vld [vmem:[%s291 + $0x38] sm:$0xf]
        %v318 = vld [vmem:[%s291 + $0x3c] sm:$0xf]
        %v319 = vld [vmem:[%s1] sm:$0xf]
        %v320 = vld [vmem:[%s1 + $0x4] sm:$0xf]
        %v321 = vld [vmem:[%s1 + $0x8] sm:$0xf]
        %v322 = vld [vmem:[%s1 + $0xc] sm:$0xf]
        %v323 = vld [vmem:[%s1 + $0x10] sm:$0xf]
        %v324 = vld [vmem:[%s1 + $0x14] sm:$0xf]
        %v325 = vld [vmem:[%s1 + $0x18] sm:$0xf]
        %v326 = vld [vmem:[%s1 + $0x1c] sm:$0xf]
        %v327 = vld [vmem:[%s1 + $0x20] sm:$0xf]
        %v328 = vld [vmem:[%s1 + $0x24] sm:$0xf]
        %v329 = vld [vmem:[%s1 + $0x28] sm:$0xf]
        %v330 = vld [vmem:[%s1 + $0x2c] sm:$0xf]
        %v331 = vld [vmem:[%s2] sm:$0x1]
        %v333 = vlaneseq
        %v334 = vshrl.u32 %v333, 7
        %v335 = vsub.s32 0, %v334
        %v336 = vrot.slane %v331, %v335
        %v354 = vunpack.c.l.b16 %v303
        %v355 = vunpack.c.l.b16 %v304
        %v356 = vunpack.c.l.b16 %v305
        %v357 = vunpack.c.l.b16 %v306
        %v358 = vunpack.c.l.b16 %v307
        %v359 = vunpack.c.l.b16 %v308
        %v360 = vunpack.c.l.b16 %v309
        %v361 = vunpack.c.l.b16 %v310
        %v362 = vunpack.c.l.b16 %v311
        %v363 = vunpack.c.l.b16 %v312
        %v364 = vunpack.c.l.b16 %v313
        %v365 = vunpack.c.l.b16 %v314
        %v366 = vunpack.c.l.b16 %v315
        %v367 = vunpack.c.l.b16 %v316
        %v368 = vunpack.c.l.b16 %v317
        %v369 = vunpack.c.l.b16 %v318
        %v370 = vpack.c.b16 %v355, %v354
        %v371 = vpack.c.b16 %v357, %v356
        %v372 = vpack.c.b16 %v359, %v358
        %v373 = vpack.c.b16 %v361, %v360
        %v374 = vpack.c.b16 %v363, %v362
        %v375 = vpack.c.b16 %v365, %v364
        %v376 = vpack.c.b16 %v367, %v366
        %v377 = vpack.c.b16 %v369, %v368
        %v390 = vunpack.c.l.b16 %v319
        %v391 = vunpack.c.l.b16 %v320
        %v392 = vunpack.c.l.b16 %v321
        %v393 = vunpack.c.l.b16 %v322
        %v394 = vunpack.c.l.b16 %v323
        %v395 = vunpack.c.l.b16 %v324
        %v396 = vunpack.c.l.b16 %v325
        %v397 = vunpack.c.l.b16 %v326
        %v398 = vunpack.c.l.b16 %v327
        %v399 = vunpack.c.l.b16 %v328
        %v400 = vunpack.c.l.b16 %v329
        %v401 = vunpack.c.l.b16 %v330
        %v402 = vpack.c.b16 %v391, %v390
        %v403 = vpack.c.b16 %v393, %v392
        %v404 = vpack.c.b16 %v395, %v394
        %v405 = vpack.c.b16 %v397, %v396
        %v406 = vpack.c.b16 %v399, %v398
        %v407 = vpack.c.b16 %v401, %v400
        %vm414 = vcmask 785408
        %v416 = vsel %vm414, %v370, 0
        %v419 = vsel %vm414, %v371, 0
        %v422 = vsel %vm414, %v372, 0
        %v425 = vsel %vm414, %v373, 0
        %v428 = vsel %vm414, %v374, 0
        %v431 = vsel %vm414, %v375, 0
        %v434 = vsel %vm414, %v376, 0
        %v437 = vsel %vm414, %v377, 0
        %439 = vmatprep.subr.bf16.mxu0 0
        %440 = vmatpush1.bf16.msra.mxu0 %v402
        %441 = vmatprep.subr.bf16.mxu0 0
        %442 = vmatpush1.bf16.msra.mxu0 %v403
        %443 = vmatprep.subr.bf16.mxu0 0
        %444 = vmatpush1.bf16.msra.mxu0 %v404
        %445 = vmatprep.subr.bf16.mxu0 0
        %446 = vmatpush1.bf16.msra.mxu0 %v405
        %447 = vmatprep.subr.bf16.mxu0 0
        %448 = vmatpush1.bf16.msra.mxu0 %v406
        %449 = vmatprep.subr.bf16.mxu0 0
        %450 = vmatpush1.bf16.msra.mxu0 %v407
        %451 = vmatprep.subr.bf16.mxu0 0
        %452 = vmatpush1.bf16.msra.mxu0 0
        %453 = vmatprep.subr.bf16.mxu0 0
        %454 = vmatpush1.bf16.msra.mxu0 0
        %455 = vmatprep.subr.bf16.mxu0 0
        %456 = vmatpush1.bf16.msra.mxu0 0
        %457 = vmatprep.subr.bf16.mxu0 0
        %458 = vmatpush1.bf16.msra.mxu0 0
        %459 = vmatprep.subr.bf16.mxu0 0
        %460 = vmatpush1.bf16.msra.mxu0 0
        %461 = vmatprep.subr.bf16.mxu0 0
        %462 = vmatpush1.bf16.msra.mxu0 0
        %463 = vmatprep.subr.bf16.mxu0 0
        %464 = vmatpush1.bf16.msra.mxu0 0
        %465 = vmatprep.subr.bf16.mxu0 0
        %466 = vmatpush1.bf16.msra.mxu0 0
        %467 = vmatprep.subr.bf16.mxu0 0
        %468 = vmatpush1.bf16.msra.mxu0 0
        %469 = vmatprep.subr.bf16.mxu0 0
        %470 = vmatpush1.bf16.msra.mxu0 0
        %471 = vmatprep.mubr.bf16.mxu0 0
        %472 = vmatmul.mubr.bf16.gmra.mrb[0].mxu0 %v416
        %v473 = vpop.f32.mrb[0].mxu0
        %v474 = vadd.f32 %v336, %v473
        %v475 = vpop.f32.mrb[0].mxu0
        %v476 = vpop.f32.mrb[0].mxu0
        %v477 = vadd.f32 %v336, %v476
        %v478 = vpop.f32.mrb[0].mxu0
        %479 = vmatprep.mubr.bf16.mxu0 0
        %480 = vmatmul.mubr.bf16.gmra.mrb[0].mxu0 %v419
        %v481 = vpop.f32.mrb[0].mxu0
        %v482 = vadd.f32 %v336, %v481
        %v483 = vpop.f32.mrb[0].mxu0
        %v484 = vpop.f32.mrb[0].mxu0
        %v485 = vadd.f32 %v336, %v484
        %v486 = vpop.f32.mrb[0].mxu0
        %487 = vmatprep.mubr.bf16.mxu0 0
        %488 = vmatmul.mubr.bf16.gmra.mrb[0].mxu0 %v422
        %v489 = vpop.f32.mrb[0].mxu0
        %v490 = vadd.f32 %v336, %v489
        %v491 = vpop.f32.mrb[0].mxu0
        %v492 = vpop.f32.mrb[0].mxu0
        %v493 = vadd.f32 %v336, %v492
        %v494 = vpop.f32.mrb[0].mxu0
        %495 = vmatprep.mubr.bf16.mxu0 0
        %496 = vmatmul.mubr.bf16.gmra.mrb[0].mxu0 %v425
        %v497 = vpop.f32.mrb[0].mxu0
        %v498 = vadd.f32 %v336, %v497
        %v499 = vpop.f32.mrb[0].mxu0
        %v500 = vpop.f32.mrb[0].mxu0
        %v501 = vadd.f32 %v336, %v500
        %v502 = vpop.f32.mrb[0].mxu0
        %503 = vmatprep.mubr.bf16.mxu0 0
        %504 = vmatmul.mubr.bf16.gmra.mrb[0].mxu0 %v428
        %v505 = vpop.f32.mrb[0].mxu0
        %v506 = vadd.f32 %v336, %v505
        %v507 = vpop.f32.mrb[0].mxu0
        %v508 = vpop.f32.mrb[0].mxu0
        %v509 = vadd.f32 %v336, %v508
        %v510 = vpop.f32.mrb[0].mxu0
        %511 = vmatprep.mubr.bf16.mxu0 0
        %512 = vmatmul.mubr.bf16.gmra.mrb[0].mxu0 %v431
        %v513 = vpop.f32.mrb[0].mxu0
        %v514 = vadd.f32 %v336, %v513
        %v515 = vpop.f32.mrb[0].mxu0
        %v516 = vpop.f32.mrb[0].mxu0
        %v517 = vadd.f32 %v336, %v516
        %v518 = vpop.f32.mrb[0].mxu0
        %519 = vmatprep.mubr.bf16.mxu0 0
        %520 = vmatmul.mubr.bf16.gmra.mrb[0].mxu0 %v434
        %v521 = vpop.f32.mrb[0].mxu0
        %v522 = vadd.f32 %v336, %v521
        %v523 = vpop.f32.mrb[0].mxu0
        %v524 = vpop.f32.mrb[0].mxu0
        %v525 = vadd.f32 %v336, %v524
        %v526 = vpop.f32.mrb[0].mxu0
        %527 = vmatprep.mubr.bf16.mxu0 0
        %528 = vmatmul.mubr.bf16.gmra.mrb[0].mxu0 %v437
        %v529 = vpop.f32.mrb[0].mxu0
        %v530 = vadd.f32 %v336, %v529
        %v531 = vpop.f32.mrb[0].mxu0
        %v532 = vpop.f32.mrb[0].mxu0
        %v533 = vadd.f32 %v336, %v532
        %v534 = vpop.f32.mrb[0].mxu0
        %535 = vdwg.mxu0
        %v536 = vmax.f32 %v474, 0.0
        %v537 = vmax.f32 %v477, 0.0
        %v538 = vmax.f32 %v482, 0.0
        %v539 = vmax.f32 %v485, 0.0
        %v540 = vmax.f32 %v490, 0.0
        %v541 = vmax.f32 %v493, 0.0
        %v542 = vmax.f32 %v498, 0.0
        %v543 = vmax.f32 %v501, 0.0
        %v544 = vmax.f32 %v506, 0.0
        %v545 = vmax.f32 %v509, 0.0
        %v546 = vmax.f32 %v514, 0.0
        %v547 = vmax.f32 %v517, 0.0
        %v548 = vmax.f32 %v522, 0.0
        %v549 = vmax.f32 %v525, 0.0
        %v550 = vmax.f32 %v530, 0.0
        %v551 = vmax.f32 %v533, 0.0
        %v552 = vpack.c.bf16 %v537, %v536
        %v553 = vpack.c.bf16 %v539, %v538
        %v554 = vpack.c.bf16 %v541, %v540
        %v555 = vpack.c.bf16 %v543, %v542
        %v556 = vpack.c.bf16 %v545, %v544
        %v557 = vpack.c.bf16 %v547, %v546
        %v558 = vpack.c.bf16 %v549, %v548
        %v559 = vpack.c.bf16 %v551, %v550
        %v560 = vld [vmem:[%s3] sm:$0xf]
        %v561 = vld [vmem:[%s3 + $0x4] sm:$0xf]
        %v562 = vld [vmem:[%s3 + $0x8] sm:$0xf]
        %v563 = vld [vmem:[%s3 + $0xc] sm:$0xf]
        %v564 = vld [vmem:[%s3 + $0x10] sm:$0xf]
        %v565 = vld [vmem:[%s3 + $0x14] sm:$0xf]
        %v566 = vld [vmem:[%s3 + $0x18] sm:$0xf]
        %v567 = vld [vmem:[%s3 + $0x1c] sm:$0xf]
        %v568 = vld [vmem:[%s4] sm:$0x1]
        %v570 = vlaneseq
        %v571 = vshrl.u32 %v570, 7
        %v572 = vsub.s32 0, %v571
        %v573 = vrot.slane %v568, %v572
        %v583 = vunpack.c.l.b16 %v560
        %v584 = vunpack.c.l.b16 %v561
        %v585 = vunpack.c.l.b16 %v562
        %v586 = vunpack.c.l.b16 %v563
        %v587 = vunpack.c.l.b16 %v564
        %v588 = vunpack.c.l.b16 %v565
        %v589 = vunpack.c.l.b16 %v566
        %v590 = vunpack.c.l.b16 %v567
        %v591 = vpack.c.b16 %v584, %v583
        %v592 = vpack.c.b16 %v586, %v585
        %v593 = vpack.c.b16 %v588, %v587
        %v594 = vpack.c.b16 %v590, %v589
        %vm599 = vcmask 523264
        %v601 = vsel %vm599, %v552, 0
        %v604 = vsel %vm599, %v553, 0
        %v607 = vsel %vm599, %v554, 0
        %v610 = vsel %vm599, %v555, 0
        %v613 = vsel %vm599, %v556, 0
        %v616 = vsel %vm599, %v557, 0
        %v619 = vsel %vm599, %v558, 0
        %v622 = vsel %vm599, %v559, 0
        %624 = vmatprep.subr.bf16.mxu0 0
        %625 = vmatpush1.bf16.msra.mxu0 %v591
        %626 = vmatprep.subr.bf16.mxu0 0
        %627 = vmatpush1.bf16.msra.mxu0 %v592
        %628 = vmatprep.subr.bf16.mxu0 0
        %629 = vmatpush1.bf16.msra.mxu0 %v593
        %630 = vmatprep.subr.bf16.mxu0 0
        %631 = vmatpush1.bf16.msra.mxu0 %v594
        %632 = vmatprep.subr.bf16.mxu0 0
        %633 = vmatpush1.bf16.msra.mxu0 0
        %634 = vmatprep.subr.bf16.mxu0 0
        %635 = vmatpush1.bf16.msra.mxu0 0
        %636 = vmatprep.subr.bf16.mxu0 0
        %637 = vmatpush1.bf16.msra.mxu0 0
        %638 = vmatprep.subr.bf16.mxu0 0
        %639 = vmatpush1.bf16.msra.mxu0 0
        %640 = vmatprep.subr.bf16.mxu0 0
        %641 = vmatpush1.bf16.msra.mxu0 0
        %642 = vmatprep.subr.bf16.mxu0 0
        %643 = vmatpush1.bf16.msra.mxu0 0
        %644 = vmatprep.subr.bf16.mxu0 0
        %645 = vmatpush1.bf16.msra.mxu0 0
        %646 = vmatprep.subr.bf16.mxu0 0
        %647 = vmatpush1.bf16.msra.mxu0 0
        %648 = vmatprep.subr.bf16.mxu0 0
        %649 = vmatpush1.bf16.msra.mxu0 0
        %650 = vmatprep.subr.bf16.mxu0 0
        %651 = vmatpush1.bf16.msra.mxu0 0
        %652 = vmatprep.subr.bf16.mxu0 0
        %653 = vmatpush1.bf16.msra.mxu0 0
        %654 = vmatprep.subr.bf16.mxu0 0
        %655 = vmatpush1.bf16.msra.mxu0 0
        %656 = vmatprep.mubr.bf16.mxu0 0
        %657 = vmatmul.mubr.bf16.gmra.mrb[0].mxu0 %v601
        %v658 = vpop.f32.mrb[0].mxu0
        %v659 = vadd.f32 %v573, %v658
        %v660 = vpop.f32.mrb[0].mxu0
        %v661 = vpop.f32.mrb[0].mxu0
        %v662 = vadd.f32 %v573, %v661
        %v663 = vpop.f32.mrb[0].mxu0
        %664 = vmatprep.mubr.bf16.mxu0 0
        %665 = vmatmul.mubr.bf16.gmra.mrb[0].mxu0 %v604
        %v666 = vpop.f32.mrb[0].mxu0
        %v667 = vadd.f32 %v573, %v666
        %v668 = vpop.f32.mrb[0].mxu0
        %v669 = vpop.f32.mrb[0].mxu0
        %v670 = vadd.f32 %v573, %v669
        %v671 = vpop.f32.mrb[0].mxu0
        %672 = vmatprep.mubr.bf16.mxu0 0
        %673 = vmatmul.mubr.bf16.gmra.mrb[0].mxu0 %v607
        %v674 = vpop.f32.mrb[0].mxu0
        %v675 = vadd.f32 %v573, %v674
        %v676 = vpop.f32.mrb[0].mxu0
        %v677 = vpop.f32.mrb[0].mxu0
        %v678 = vadd.f32 %v573, %v677
        %v679 = vpop.f32.mrb[0].mxu0
        %680 = vmatprep.mubr.bf16.mxu0 0
        %681 = vmatmul.mubr.bf16.gmra.mrb[0].mxu0 %v610
        %v682 = vpop.f32.mrb[0].mxu0
        %v683 = vadd.f32 %v573, %v682
        %v684 = vpop.f32.mrb[0].mxu0
        %v685 = vpop.f32.mrb[0].mxu0
        %v686 = vadd.f32 %v573, %v685
        %v687 = vpop.f32.mrb[0].mxu0
        %688 = vmatprep.mubr.bf16.mxu0 0
        %689 = vmatmul.mubr.bf16.gmra.mrb[0].mxu0 %v613
        %v690 = vpop.f32.mrb[0].mxu0
        %v691 = vadd.f32 %v573, %v690
        %v692 = vpop.f32.mrb[0].mxu0
        %v693 = vpop.f32.mrb[0].mxu0
        %v694 = vadd.f32 %v573, %v693
        %v695 = vpop.f32.mrb[0].mxu0
        %696 = vmatprep.mubr.bf16.mxu0 0
        %697 = vmatmul.mubr.bf16.gmra.mrb[0].mxu0 %v616
        %v698 = vpop.f32.mrb[0].mxu0
        %v699 = vadd.f32 %v573, %v698
        %v700 = vpop.f32.mrb[0].mxu0
        %v701 = vpop.f32.mrb[0].mxu0
        %v702 = vadd.f32 %v573, %v701
        %v703 = vpop.f32.mrb[0].mxu0
        %704 = vmatprep.mubr.bf16.mxu0 0
        %705 = vmatmul.mubr.bf16.gmra.mrb[0].mxu0 %v619
        %v706 = vpop.f32.mrb[0].mxu0
        %v707 = vadd.f32 %v573, %v706
        %v708 = vpop.f32.mrb[0].mxu0
        %v709 = vpop.f32.mrb[0].mxu0
        %v710 = vadd.f32 %v573, %v709
        %v711 = vpop.f32.mrb[0].mxu0
        %712 = vmatprep.mubr.bf16.mxu0 0
        %713 = vmatmul.mubr.bf16.gmra.mrb[0].mxu0 %v622
        %v714 = vpop.f32.mrb[0].mxu0
        %v715 = vadd.f32 %v573, %v714
        %v716 = vpop.f32.mrb[0].mxu0
        %v717 = vpop.f32.mrb[0].mxu0
        %v718 = vadd.f32 %v573, %v717
        %v719 = vpop.f32.mrb[0].mxu0
        %720 = vdwg.mxu0
        %v721 = vmax.f32 %v659, 0.0
        %v722 = vmax.f32 %v662, 0.0
        %v723 = vmax.f32 %v667, 0.0
        %v724 = vmax.f32 %v670, 0.0
        %v725 = vmax.f32 %v675, 0.0
        %v726 = vmax.f32 %v678, 0.0
        %v727 = vmax.f32 %v683, 0.0
        %v728 = vmax.f32 %v686, 0.0
        %v729 = vmax.f32 %v691, 0.0
        %v730 = vmax.f32 %v694, 0.0
        %v731 = vmax.f32 %v699, 0.0
        %v732 = vmax.f32 %v702, 0.0
        %v733 = vmax.f32 %v707, 0.0
        %v734 = vmax.f32 %v710, 0.0
        %v735 = vmax.f32 %v715, 0.0
        %v736 = vmax.f32 %v718, 0.0
        %v737 = vpack.c.bf16 %v722, %v721
        %v738 = vpack.c.bf16 %v724, %v723
        %v739 = vpack.c.bf16 %v726, %v725
        %v740 = vpack.c.bf16 %v728, %v727
        %v741 = vpack.c.bf16 %v730, %v729
        %v742 = vpack.c.bf16 %v732, %v731
        %v743 = vpack.c.bf16 %v734, %v733
        %v744 = vpack.c.bf16 %v736, %v735
        %v745 = vld [vmem:[%s5] sm:$0xf]
        %v746 = vld [vmem:[%s5 + $0x4] sm:$0xf]
        %v747 = vld [vmem:[%s5 + $0x8] sm:$0xf]
        %v748 = vld [vmem:[%s5 + $0xc] sm:$0xf]
        %v749 = vld [vmem:[#allocation2] sm:$0x1]
        %v751 = vlaneseq
        %v752 = vshrl.u32 %v751, 7
        %v753 = vsub.s32 0, %v752
        %v754 = vrot.slane %v749, %v753
        %v760 = vunpack.c.l.b16 %v745
        %v761 = vunpack.c.l.b16 %v746
        %v762 = vunpack.c.l.b16 %v747
        %v763 = vunpack.c.l.b16 %v748
        %v764 = vpack.c.b16 %v761, %v760
        %v765 = vpack.c.b16 %v763, %v762
        %vm768 = vcmask 261120
        %v770 = vsel %vm768, %v737, 0
        %v773 = vsel %vm768, %v738, 0
        %v776 = vsel %vm768, %v739, 0
        %v779 = vsel %vm768, %v740, 0
        %v782 = vsel %vm768, %v741, 0
        %v785 = vsel %vm768, %v742, 0
        %v788 = vsel %vm768, %v743, 0
        %v791 = vsel %vm768, %v744, 0
        %793 = vmatprep.subr.bf16.mxu0 0
        %794 = vmatpush1.bf16.msra.mxu0 %v764
        %795 = vmatprep.subr.bf16.mxu0 0
        %796 = vmatpush1.bf16.msra.mxu0 %v765
        %797 = vmatprep.subr.bf16.mxu0 0
        %798 = vmatpush1.bf16.msra.mxu0 0
        %799 = vmatprep.subr.bf16.mxu0 0
        %800 = vmatpush1.bf16.msra.mxu0 0
        %801 = vmatprep.subr.bf16.mxu0 0
        %802 = vmatpush1.bf16.msra.mxu0 0
        %803 = vmatprep.subr.bf16.mxu0 0
        %804 = vmatpush1.bf16.msra.mxu0 0
        %805 = vmatprep.subr.bf16.mxu0 0
        %806 = vmatpush1.bf16.msra.mxu0 0
        %807 = vmatprep.subr.bf16.mxu0 0
        %808 = vmatpush1.bf16.msra.mxu0 0
        %809 = vmatprep.subr.bf16.mxu0 0
        %810 = vmatpush1.bf16.msra.mxu0 0
        %811 = vmatprep.subr.bf16.mxu0 0
        %812 = vmatpush1.bf16.msra.mxu0 0
        %813 = vmatprep.subr.bf16.mxu0 0
        %814 = vmatpush1.bf16.msra.mxu0 0
        %815 = vmatprep.subr.bf16.mxu0 0
        %816 = vmatpush1.bf16.msra.mxu0 0
        %817 = vmatprep.subr.bf16.mxu0 0
        %818 = vmatpush1.bf16.msra.mxu0 0
        %819 = vmatprep.subr.bf16.mxu0 0
        %820 = vmatpush1.bf16.msra.mxu0 0
        %821 = vmatprep.subr.bf16.mxu0 0
        %822 = vmatpush1.bf16.msra.mxu0 0
        %823 = vmatprep.subr.bf16.mxu0 0
        %824 = vmatpush1.bf16.msra.mxu0 0
        %825 = vmatprep.mubr.bf16.mxu0 0
        %826 = vmatmul.mubr.bf16.gmra.mrb[0].mxu0 %v770
        %v827 = vpop.f32.mrb[0].mxu0
        %v828 = vadd.f32 %v754, %v827
        %v829 = vpop.f32.mrb[0].mxu0
        %v830 = vpop.f32.mrb[0].mxu0
        %v831 = vadd.f32 %v754, %v830
        %v832 = vpop.f32.mrb[0].mxu0
        %833 = vmatprep.mubr.bf16.mxu0 0
        %834 = vmatmul.mubr.bf16.gmra.mrb[0].mxu0 %v773
        %v835 = vpop.f32.mrb[0].mxu0
        %v836 = vadd.f32 %v754, %v835
        %v837 = vpop.f32.mrb[0].mxu0
        %v838 = vpop.f32.mrb[0].mxu0
        %v839 = vadd.f32 %v754, %v838
        %v840 = vpop.f32.mrb[0].mxu0
        %841 = vmatprep.mubr.bf16.mxu0 0
        %842 = vmatmul.mubr.bf16.gmra.mrb[0].mxu0 %v776
        %v843 = vpop.f32.mrb[0].mxu0
        %v844 = vadd.f32 %v754, %v843
        %v845 = vpop.f32.mrb[0].mxu0
        %v846 = vpop.f32.mrb[0].mxu0
        %v847 = vadd.f32 %v754, %v846
        %v848 = vpop.f32.mrb[0].mxu0
        %849 = vmatprep.mubr.bf16.mxu0 0
        %850 = vmatmul.mubr.bf16.gmra.mrb[0].mxu0 %v779
        %v851 = vpop.f32.mrb[0].mxu0
        %v852 = vadd.f32 %v754, %v851
        %v853 = vpop.f32.mrb[0].mxu0
        %v854 = vpop.f32.mrb[0].mxu0
        %v855 = vadd.f32 %v754, %v854
        %v856 = vpop.f32.mrb[0].mxu0
        %857 = vmatprep.mubr.bf16.mxu0 0
        %858 = vmatmul.mubr.bf16.gmra.mrb[0].mxu0 %v782
        %v859 = vpop.f32.mrb[0].mxu0
        %v860 = vadd.f32 %v754, %v859
        %v861 = vpop.f32.mrb[0].mxu0
        %v862 = vpop.f32.mrb[0].mxu0
        %v863 = vadd.f32 %v754, %v862
        %v864 = vpop.f32.mrb[0].mxu0
        %865 = vmatprep.mubr.bf16.mxu0 0
        %866 = vmatmul.mubr.bf16.gmra.mrb[0].mxu0 %v785
        %v867 = vpop.f32.mrb[0].mxu0
        %v868 = vadd.f32 %v754, %v867
        %v869 = vpop.f32.mrb[0].mxu0
        %v870 = vpop.f32.mrb[0].mxu0
        %v871 = vadd.f32 %v754, %v870
        %v872 = vpop.f32.mrb[0].mxu0
        %873 = vmatprep.mubr.bf16.mxu0 0
        %874 = vmatmul.mubr.bf16.gmra.mrb[0].mxu0 %v788
        %v875 = vpop.f32.mrb[0].mxu0
        %v876 = vadd.f32 %v754, %v875
        %v877 = vpop.f32.mrb[0].mxu0
        %v878 = vpop.f32.mrb[0].mxu0
        %v879 = vadd.f32 %v754, %v878
        %v880 = vpop.f32.mrb[0].mxu0
        %881 = vmatprep.mubr.bf16.mxu0 0
        %882 = vmatmul.mubr.bf16.gmra.mrb[0].mxu0 %v791
        %v883 = vpop.f32.mrb[0].mxu0
        %v884 = vadd.f32 %v754, %v883
        %v885 = vpop.f32.mrb[0].mxu0
        %v886 = vpop.f32.mrb[0].mxu0
        %v887 = vadd.f32 %v754, %v886
        %v888 = vpop.f32.mrb[0].mxu0
        %889 = vdwg.mxu0
        %vm890 = vcmask 7168
        %891 = vst.msk [vmem:[%s282] sm:$0xff] %vm890, %v828
        %892 = vst.msk [vmem:[%s282 + $0x8] sm:$0xff] %vm890, %v831
        %893 = vst.msk [vmem:[%s282 + $0x10] sm:$0xff] %vm890, %v836
        %894 = vst.msk [vmem:[%s282 + $0x18] sm:$0xff] %vm890, %v839
        %895 = vst.msk [vmem:[%s282 + $0x20] sm:$0xff] %vm890, %v844
        %896 = vst.msk [vmem:[%s282 + $0x28] sm:$0xff] %vm890, %v847
        %897 = vst.msk [vmem:[%s282 + $0x30] sm:$0xff] %vm890, %v852
        %898 = vst.msk [vmem:[%s282 + $0x38] sm:$0xff] %vm890, %v855
        %899 = vst.msk [vmem:[%s282 + $0x40] sm:$0xff] %vm890, %v860
        %900 = vst.msk [vmem:[%s282 + $0x48] sm:$0xff] %vm890, %v863
        %901 = vst.msk [vmem:[%s282 + $0x50] sm:$0xff] %vm890, %v868
        %902 = vst.msk [vmem:[%s282 + $0x58] sm:$0xff] %vm890, %v871
        %903 = vst.msk [vmem:[%s282 + $0x60] sm:$0xff] %vm890, %v876
        %904 = vst.msk [vmem:[%s282 + $0x68] sm:$0xff] %vm890, %v879
        %905 = vst.msk [vmem:[%s282 + $0x70] sm:$0xff] %vm890, %v884
        %906 = vst.msk [vmem:[%s282 + $0x78] sm:$0xff] %vm890, %v887
        %s907 = sand.u32 %s180, 1
        %s908 = sand.u32 %s180, 1
        %s909 = smul.addr %s908, 128
        %s910 = scalar_lea.vmem [#allocation3], %s909
        // Predicated region
        $region49: #{tpu_custom_call.1} parent=47 // pred_check
          %p911 = pneg %p190
        $region50: #{tpu_custom_call.1} parent=47 // pred_check_branch
          %913 = sbr.rel (%p911) target = $region52
        $region51: #{tpu_custom_call.1} parent=47 // pred_region
          %s914 = smul.u32 16, %s20
          %s915 = ssub.s32 25, %s914
          %p916 = scmp.lt.s32.totalorder %s915, 16
          %s917 = scalar_select %p916, %s915, 16
          %s918 = smul.u32 128, %s917
          %p919 = scmp.ne.s32.totalorder 0, %s918
          %s920 = smul.addr %s914, 8
          %s921 = scalar_lea.vmem %s7, %s920
          // Predicated region
          $region53: #{tpu_custom_call.1} parent=51 // pred_check
            %p922 = pneg %p919
          $region54: #{tpu_custom_call.1} parent=51 // pred_check_branch
            %924 = sbr.rel (%p922) target = $region56
          $region55: #{tpu_custom_call.1} parent=51 // pred_region
            // Predicated region
            $region57: #{tpu_custom_call.1} parent=55 // pred_check
              _
            $region58: #{tpu_custom_call.1} parent=55 // pred_check_branch
              %926 = sbr.rel (0) target = $region60
            $region59: #{tpu_custom_call.1} parent=55 // pred_region
              // Predicated region
              $region79: #{tpu_custom_call.1} parent=59 // pred_check
                _
              $region80: #{tpu_custom_call.1} parent=59 // pred_check_branch
                %1005 = sbr.rel (0) target = $region82
              $region81: #{tpu_custom_call.1} parent=59 // pred_region
                %s1006 = sshrl.u32 %s917, 4
                // While loop
                $region83: #{tpu_custom_call.1} parent=81 // loop_pre_header
                  _
                $region84: #{tpu_custom_call.1} parent=81 // loop_header
                  %s1008 = sphi 0, %s1010
                  %p1009 = scmp.ge.s32.totalorder %s1008, %s1006
                  %s1013 = sphi 0, %s1050
                  %s1014 = sphi %s910, %s1053
                  %s1015 = sphi %s921, %s1054
                $region85: #{tpu_custom_call.1} parent=81 // loop_header_branch
                  %1012 = sbr.rel (%p1009) target = $region89
                $region86: #{tpu_custom_call.1} parent=81 // loop_body
                  %v1016 = vld [vmem:[%s1014] sm:$0xff]
                  %1017 = vst [vmem:[%s1015] sm:$0xff] %v1016
                  %v1018 = vld [vmem:[%s1014 + $0x8] sm:$0xff]
                  %1019 = vst [vmem:[%s1015 + $0x8] sm:$0xff] %v1018
                  %v1020 = vld [vmem:[%s1014 + $0x10] sm:$0xff]
                  %1021 = vst [vmem:[%s1015 + $0x10] sm:$0xff] %v1020
                  %v1022 = vld [vmem:[%s1014 + $0x18] sm:$0xff]
                  %1023 = vst [vmem:[%s1015 + $0x18] sm:$0xff] %v1022
                  %v1024 = vld [vmem:[%s1014 + $0x20] sm:$0xff]
                  %1025 = vst [vmem:[%s1015 + $0x20] sm:$0xff] %v1024
                  %v1026 = vld [vmem:[%s1014 + $0x28] sm:$0xff]
                  %1027 = vst [vmem:[%s1015 + $0x28] sm:$0xff] %v1026
                  %v1028 = vld [vmem:[%s1014 + $0x30] sm:$0xff]
                  %1029 = vst [vmem:[%s1015 + $0x30] sm:$0xff] %v1028
                  %v1030 = vld [vmem:[%s1014 + $0x38] sm:$0xff]
                  %1031 = vst [vmem:[%s1015 + $0x38] sm:$0xff] %v1030
                  %v1032 = vld [vmem:[%s1014 + $0x40] sm:$0xff]
                  %1033 = vst [vmem:[%s1015 + $0x40] sm:$0xff] %v1032
                  %v1034 = vld [vmem:[%s1014 + $0x48] sm:$0xff]
                  %1035 = vst [vmem:[%s1015 + $0x48] sm:$0xff] %v1034
                  %v1036 = vld [vmem:[%s1014 + $0x50] sm:$0xff]
                  %1037 = vst [vmem:[%s1015 + $0x50] sm:$0xff] %v1036
                  %v1038 = vld [vmem:[%s1014 + $0x58] sm:$0xff]
                  %1039 = vst [vmem:[%s1015 + $0x58] sm:$0xff] %v1038
                  %v1040 = vld [vmem:[%s1014 + $0x60] sm:$0xff]
                  %1041 = vst [vmem:[%s1015 + $0x60] sm:$0xff] %v1040
                  %v1042 = vld [vmem:[%s1014 + $0x68] sm:$0xff]
                  %1043 = vst [vmem:[%s1015 + $0x68] sm:$0xff] %v1042
                  %v1044 = vld [vmem:[%s1014 + $0x70] sm:$0xff]
                  %1045 = vst [vmem:[%s1015 + $0x70] sm:$0xff] %v1044
                  %v1046 = vld [vmem:[%s1014 + $0x78] sm:$0xff]
                  %1047 = vst [vmem:[%s1015 + $0x78] sm:$0xff] %v1046
                  %s1048 = sadd.s32 1, %s1013
                  %p1049 = scmp.ge.s32.totalorder %s1048, %s1006
                  %s1050 = scalar_select %p1049, 0, %s1048
                  %s1051 = smul.u32 %s1050, 128
                  %s1052 = smul.u32 %s1050, 128
                  %s1053 = scalar_lea.vmem %s910, %s1051 [#allocation3]
                  %s1054 = scalar_lea.vmem %s921, %s1052
                $region87: #{tpu_custom_call.1} parent=81 // loop_footer
                  %s1010 = sadd.s32 %s1008, 1
                $region88: #{tpu_custom_call.1} parent=81 // loop_footer_branch
                  %1007 = sbr.rel target = $region84
                $region89: #{tpu_custom_call.1} parent=81 // loop_exit
                  _
                %s1055 = sshrl.u32 %s917, 4
                %s1056 = sand.u32 %s917, 15
                %s1057 = smul.u32 %s1055, 16
                %s1058 = smul.u32 8, %s1057
                %s1059 = scalar_lea.vmem %s910, %s1058 [#allocation3]
                %s1060 = smul.u32 8, %s1057
                %s1061 = scalar_lea.vmem %s921, %s1060
                // While loop
                $region90: #{tpu_custom_call.1} parent=81 // loop_pre_header
                  _
                $region91: #{tpu_custom_call.1} parent=81 // loop_header
                  %s1063 = sphi 0, %s1065
                  %p1064 = scmp.ge.s32.totalorder %s1063, %s1056
                  %s1068 = sphi 0, %s1075
                  %s1069 = sphi %s1059, %s1078
                  %s1070 = sphi %s1061, %s1079
                $region92: #{tpu_custom_call.1} parent=81 // loop_header_branch
                  %1067 = sbr.rel (%p1064) target = $region96
                $region93: #{tpu_custom_call.1} parent=81 // loop_body
                  %v1071 = vld [vmem:[%s1069] sm:$0xff]
                  %1072 = vst [vmem:[%s1070] sm:$0xff] %v1071
                  %s1073 = sadd.s32 1, %s1068
                  %p1074 = scmp.ge.s32.totalorder %s1073, %s1056
                  %s1075 = scalar_select %p1074, 0, %s1073
                  %s1076 = smul.u32 %s1075, 8
                  %s1077 = smul.u32 %s1075, 8
                  %s1078 = scalar_lea.vmem %s1059, %s1076 [#allocation3]
                  %s1079 = scalar_lea.vmem %s1061, %s1077
                $region94: #{tpu_custom_call.1} parent=81 // loop_footer
                  %s1065 = sadd.s32 %s1063, 1
                $region95: #{tpu_custom_call.1} parent=81 // loop_footer_branch
                  %1062 = sbr.rel target = $region91
                $region96: #{tpu_custom_call.1} parent=81 // loop_exit
                  _
              $region82: #{tpu_custom_call.1} parent=59 // pred_fallthru
                _
              // Predicated region
              $region97: #{tpu_custom_call.1} parent=59 // pred_check
                _
              $region98: #{tpu_custom_call.1} parent=59 // pred_check_branch
                %1081 = sbr.rel target = $region100
              $region99: #{tpu_custom_call.1} parent=59 // pred_region
                _
              $region100: #{tpu_custom_call.1} parent=59 // pred_fallthru
                _
            $region60: #{tpu_custom_call.1} parent=55 // pred_fallthru
              _
            // Predicated region
            $region61: #{tpu_custom_call.1} parent=55 // pred_check
              _
            $region62: #{tpu_custom_call.1} parent=55 // pred_check_branch
              %928 = sbr.rel target = $region64
            $region63: #{tpu_custom_call.1} parent=55 // pred_region
              %s930 = sshrl.u32 %s917, 4
              // While loop
              $region65: #{tpu_custom_call.1} parent=63 // loop_pre_header
                _
              $region66: #{tpu_custom_call.1} parent=63 // loop_header
                %s932 = sphi 0, %s934
                %p933 = scmp.ge.s32.totalorder %s932, %s930
                %s937 = sphi 0, %s974
                %s938 = sphi %s910, %s977
                %s939 = sphi %s921, %s978
              $region67: #{tpu_custom_call.1} parent=63 // loop_header_branch
                %936 = sbr.rel (%p933) target = $region71
              $region68: #{tpu_custom_call.1} parent=63 // loop_body
                %v940 = vld [vmem:[%s938] sm:$0xff]
                %941 = vst [vmem:[%s939] sm:$0xff] %v940
                %v942 = vld [vmem:[%s938 + $0x8] sm:$0xff]
                %943 = vst [vmem:[%s939 + $0x8] sm:$0xff] %v942
                %v944 = vld [vmem:[%s938 + $0x10] sm:$0xff]
                %945 = vst [vmem:[%s939 + $0x10] sm:$0xff] %v944
                %v946 = vld [vmem:[%s938 + $0x18] sm:$0xff]
                %947 = vst [vmem:[%s939 + $0x18] sm:$0xff] %v946
                %v948 = vld [vmem:[%s938 + $0x20] sm:$0xff]
                %949 = vst [vmem:[%s939 + $0x20] sm:$0xff] %v948
                %v950 = vld [vmem:[%s938 + $0x28] sm:$0xff]
                %951 = vst [vmem:[%s939 + $0x28] sm:$0xff] %v950
                %v952 = vld [vmem:[%s938 + $0x30] sm:$0xff]
                %953 = vst [vmem:[%s939 + $0x30] sm:$0xff] %v952
                %v954 = vld [vmem:[%s938 + $0x38] sm:$0xff]
                %955 = vst [vmem:[%s939 + $0x38] sm:$0xff] %v954
                %v956 = vld [vmem:[%s938 + $0x40] sm:$0xff]
                %957 = vst [vmem:[%s939 + $0x40] sm:$0xff] %v956
                %v958 = vld [vmem:[%s938 + $0x48] sm:$0xff]
                %959 = vst [vmem:[%s939 + $0x48] sm:$0xff] %v958
                %v960 = vld [vmem:[%s938 + $0x50] sm:$0xff]
                %961 = vst [vmem:[%s939 + $0x50] sm:$0xff] %v960
                %v962 = vld [vmem:[%s938 + $0x58] sm:$0xff]
                %963 = vst [vmem:[%s939 + $0x58] sm:$0xff] %v962
                %v964 = vld [vmem:[%s938 + $0x60] sm:$0xff]
                %965 = vst [vmem:[%s939 + $0x60] sm:$0xff] %v964
                %v966 = vld [vmem:[%s938 + $0x68] sm:$0xff]
                %967 = vst [vmem:[%s939 + $0x68] sm:$0xff] %v966
                %v968 = vld [vmem:[%s938 + $0x70] sm:$0xff]
                %969 = vst [vmem:[%s939 + $0x70] sm:$0xff] %v968
                %v970 = vld [vmem:[%s938 + $0x78] sm:$0xff]
                %971 = vst [vmem:[%s939 + $0x78] sm:$0xff] %v970
                %s972 = sadd.s32 1, %s937
                %p973 = scmp.ge.s32.totalorder %s972, %s930
                %s974 = scalar_select %p973, 0, %s972
                %s975 = smul.u32 %s974, 128
                %s976 = smul.u32 %s974, 128
                %s977 = scalar_lea.vmem %s910, %s975 [#allocation3]
                %s978 = scalar_lea.vmem %s921, %s976
              $region69: #{tpu_custom_call.1} parent=63 // loop_footer
                %s934 = sadd.s32 %s932, 1
              $region70: #{tpu_custom_call.1} parent=63 // loop_footer_branch
                %931 = sbr.rel target = $region66
              $region71: #{tpu_custom_call.1} parent=63 // loop_exit
                _
              %s979 = sshrl.u32 %s917, 4
              %s980 = sand.u32 %s917, 15
              %s981 = smul.u32 %s979, 16
              %s982 = smul.u32 8, %s981
              %s983 = scalar_lea.vmem %s910, %s982 [#allocation3]
              %s984 = smul.u32 8, %s981
              %s985 = scalar_lea.vmem %s921, %s984
              // While loop
              $region72: #{tpu_custom_call.1} parent=63 // loop_pre_header
                _
              $region73: #{tpu_custom_call.1} parent=63 // loop_header
                %s987 = sphi 0, %s989
                %p988 = scmp.ge.s32.totalorder %s987, %s980
                %s992 = sphi 0, %s999
                %s993 = sphi %s983, %s1002
                %s994 = sphi %s985, %s1003
              $region74: #{tpu_custom_call.1} parent=63 // loop_header_branch
                %991 = sbr.rel (%p988) target = $region78
              $region75: #{tpu_custom_call.1} parent=63 // loop_body
                %v995 = vld [vmem:[%s993] sm:$0xff]
                %996 = vst [vmem:[%s994] sm:$0xff] %v995
                %s997 = sadd.s32 1, %s992
                %p998 = scmp.ge.s32.totalorder %s997, %s980
                %s999 = scalar_select %p998, 0, %s997
                %s1000 = smul.u32 %s999, 8
                %s1001 = smul.u32 %s999, 8
                %s1002 = scalar_lea.vmem %s983, %s1000 [#allocation3]
                %s1003 = scalar_lea.vmem %s985, %s1001
              $region76: #{tpu_custom_call.1} parent=63 // loop_footer
                %s989 = sadd.s32 %s987, 1
              $region77: #{tpu_custom_call.1} parent=63 // loop_footer_branch
                %986 = sbr.rel target = $region73
              $region78: #{tpu_custom_call.1} parent=63 // loop_exit
                _
            $region64: #{tpu_custom_call.1} parent=55 // pred_fallthru
              _
          $region56: #{tpu_custom_call.1} parent=51 // pred_fallthru
            _
          %1082 = vnop
        $region52: #{tpu_custom_call.1} parent=47 // pred_fallthru
          _
      $region48: #{tpu_custom_call.1} parent=5 // pred_fallthru
        _
      %p1083 = scmp.le.s32.totalorder 2, %s15
      // Predicated region
      $region101: #{tpu_custom_call.1} parent=5 // pred_check
        %p1084 = pneg %p1083
      $region102: #{tpu_custom_call.1} parent=5 // pred_check_branch
        %1086 = sbr.rel (%p1084) target = $region104
      $region103: #{tpu_custom_call.1} parent=5 // pred_region
        %s1087 = ssub.s32 %s15, 2
        // Predicated region
        $region105: #{tpu_custom_call.1} parent=103 // pred_check
          %p1088 = pneg %p196
        $region106: #{tpu_custom_call.1} parent=103 // pred_check_branch
          %1090 = sbr.rel (%p1088) target = $region108
        $region107: #{tpu_custom_call.1} parent=103 // pred_region
          %s1091 = sand.u32 %s181, 1
          %s1092 = sand.u32 %s181, 1
          %s1093 = smul.addr %s1092, 128
          %s1094 = scalar_lea.vmem [#allocation3], %s1093
        $region108: #{tpu_custom_call.1} parent=103 // pred_fallthru
          _
      $region104: #{tpu_custom_call.1} parent=5 // pred_fallthru
        _
    $region6: #{tpu_custom_call.1} parent=1 // loop_footer
      %s19 = sadd.s32 1, %s15
    $region7: #{tpu_custom_call.1} parent=1 // loop_footer_branch
      %14 = sbr.rel target = $region3
    $region8: #{tpu_custom_call.1} parent=1 // loop_exit
      _

</llo_original>
